<compile_context>
chip_gen: v7x
topology: tpu7x:2x2x1
jax: 0.10.0
libtpu: 0.0.40
codegen_flags: <defaults>
</compile_context>

<pallas_src>
import functools

import numpy as np
import jax
import jax.numpy as jnp
from jax.experimental import pallas as pl
from jax.experimental.pallas import tpu as pltpu

_BERT_DIM = 768
_LANE = 128
_SUBLANE = 8


def _round_up(x, m):
    return (x + m - 1) // m * m


def _mlp_head_kernel(x_ref, w1_ref, b1_ref, w2_ref, b2_ref, o_ref):
    """Fused Linear(768->Hp) -> ReLU -> Linear(Hp->Cp) on one (tile, 768) seq slab."""
    # In-kernel cast: no wrapper-side pad/astype pass ever touches x.  When forward()
    # already produced bf16 (cast fused into the concat producer) this is a no-op.
    x = x_ref[...].astype(jnp.bfloat16)                               # (tile, 768)
    h = jnp.dot(x, w1_ref[...], preferred_element_type=jnp.float32)   # MXU, f32 acc
    h = jnp.maximum(h + b1_ref[...], 0.0)                             # bias + ReLU in f32
    # h rounded to bf16 for the second MXU pass (documented extra precision loss).
    out = jnp.dot(h.astype(jnp.bfloat16), w2_ref[...],
                  preferred_element_type=jnp.float32)
    o_ref[...] = (out + b2_ref[...]).astype(o_ref.dtype)


@functools.partial(jax.jit, static_argnames=("max_seq_tile", "out_dtype"))
def bert_crf_head(bert_out, w1, b1, w2, b2, *, max_seq_tile=1024,
                  out_dtype=jnp.float32):
    """Linear->ReLU->Linear head over BERT features.

    bert_out : [S, 768] float32 or bfloat16 (any S; NOT padded by this wrapper)
    w1 : [768, H], b1 : [H], w2 : [H, C], b2 : [C]   (stored [in, out], i.e. the
         PyTorch [out, in] weight pre-transposed so the kernel does x @ W directly)
    returns  : [S, C] in out_dtype
    """
    S, D = bert_out.shape
    H = w1.shape[1]
    C = w2.shape[1]

    # Lane-dense padding of hidden / output feature dims to 128 (exactly 128, not 256:
    # we are HBM-bound, wider MXU tiles would only add wasted FLOPs + writeback).
    # Zero padding is exact: padded b1 entries are 0 -> ReLU(0)=0 feeds zero w2 rows;
    # padded output columns are sliced off below.
    Hp = _round_up(H, _LANE)
    Cp = _round_up(C, _LANE)

    # Seq tile: >= 2 grid steps whenever S > 8 (v7x megacore sharding), 8-row aligned,
    # capped at max_seq_tile.  grid uses cdiv so S is never padded up to a full tile;
    # a ragged last block is masked by Pallas (rows are independent through the MLP,
    # so any garbage in the out-of-bounds rows never reaches valid outputs).
    tile = max(_SUBLANE, min(max_seq_tile, _round_up(pl.cdiv(S, 2), _SUBLANE)))
    grid = (pl.cdiv(S, tile),)

    w1p = jnp.pad(w1, ((0, 0), (0, Hp - H))).astype(jnp.bfloat16)
    w2p = jnp.pad(w2, ((0, Hp - H), (0, Cp - C))).astype(jnp.bfloat16)
    b1p = jnp.pad(b1, (0, Hp - H)).reshape(1, Hp).astype(jnp.float32)
    b2p = jnp.pad(b2, (0, Cp - C)).reshape(1, Cp).astype(jnp.float32)

    out_itemsize = np.dtype(out_dtype).itemsize
    flops = 2 * S * D * Hp + 2 * S * Hp * Cp
    bytes_accessed = int(
        bert_out.size * np.dtype(bert_out.dtype).itemsize   # x (bf16 when from forward)
        + w1p.size * 2 + w2p.size * 2                        # bf16 weights
        + b1p.size * 4 + b2p.size * 4                        # f32 biases
        + S * Cp * out_itemsize                              # output writeback
    )

    out = pl.pallas_call(
        _mlp_head_kernel,
        out_shape=jax.ShapeDtypeStruct((S, Cp), out_dtype),
        grid_spec=pltpu.PrefetchScalarGridSpec(
            num_scalar_prefetch=0,
            grid=grid,
            in_specs=[
                pl.BlockSpec((tile, D), lambda i: (i, 0)),   # x seq tile (pipelined)
                pl.BlockSpec((D, Hp), lambda i: (0, 0)),     # w1 (resident)
                pl.BlockSpec((1, Hp), lambda i: (0, 0)),     # b1
                pl.BlockSpec((Hp, Cp), lambda i: (0, 0)),    # w2 (resident)
                pl.BlockSpec((1, Cp), lambda i: (0, 0)),     # b2
            ],
            out_specs=pl.BlockSpec((tile, Cp), lambda i: (i, 0)),
        ),
        compiler_params=pltpu.CompilerParams(
            dimension_semantics=("parallel",),
            vmem_limit_bytes=32 * 1024 * 1024,
        ),
        cost_estimate=pl.CostEstimate(
            flops=flops, transcendentals=0, bytes_accessed=bytes_accessed),
    )(bert_out, w1p, b1p, w2p, b2p)

    return out[:, :C]


class BertCrfPallas:
    """Minimal JAX analogue of BERT_CRF: holds head params, forward over sentences."""

    def __init__(self, n_classes_output, hidden_size, key):
        self.hidden_size = hidden_size
        self.n_classes_output = n_classes_output
        k1, k2, k3, k4 = jax.random.split(key, 4)
        # Deterministic synthetic init (stand-in for nn.Linear default init),
        # stored [in, out] so x @ W matches PyTorch's x @ W.T.
        self.w1 = (jax.random.normal(k1, (_BERT_DIM, hidden_size), jnp.float32)
                   * (1.0 / jnp.sqrt(float(_BERT_DIM))))
        self.b1 = jax.random.normal(k2, (hidden_size,), jnp.float32) * 0.01
        self.w2 = (jax.random.normal(k3, (hidden_size, n_classes_output), jnp.float32)
                   * (1.0 / jnp.sqrt(float(hidden_size))))
        self.b2 = jax.random.normal(k4, (n_classes_output,), jnp.float32) * 0.01

    def forward(self, bert_features_list):
        """bert_features_list: list of [1, S_i, 768] arrays (one per combined sentence),
        mirroring bert_out in the PyTorch forward. Returns list of [1, S_i, C] logits.

        All sentences are fused into ONE producer (bf16 cast + concat + zero-fill to a
        128-row bucket), so the features land in HBM exactly once already in bf16,
        then a single pallas_call processes the slab; results are split per sentence.
        """
        lens = [int(f.shape[1]) for f in bert_features_list]
        total = sum(lens)
        # Bucket concatenated length to a multiple of 128 -> few static compile shapes
        # for serving; the zero tail is generated inside the same concat (no pad pass).
        bucket = max(_LANE, _round_up(total, _LANE))
        parts = [f[0].astype(jnp.bfloat16) for f in bert_features_list]
        if bucket > total:
            parts.append(jnp.zeros((bucket - total, _BERT_DIM), jnp.bfloat16))
        x_all = jnp.concatenate(parts, axis=0)                  # [bucket, 768] bf16
        logits_all = bert_crf_head(x_all, self.w1, self.b1, self.w2, self.b2)
        out, off = [], 0
        for L in lens:
            out.append(logits_all[off:off + L][None, :, :])     # [1, S_i, C] like PyTorch
            off += L
        return out


def _reference_head(x, w1, b1, w2, b2):
    h = jnp.maximum(x @ w1 + b1, 0.0)
    return h @ w2 + b2


if __name__ == "__main__":
    key = jax.random.PRNGKey(0)
    k_model, k_feat1, k_feat2 = jax.random.split(key, 3)

    hidden_size = 32
    n_classes_output = 8
    model = BertCrfPallas(n_classes_output, hidden_size, k_model)

    # Two "combined sentences" of BERT features (batch dim 1, as in the PyTorch loop).
    seq1, seq2 = 16, 8
    feats = [
        jax.random.normal(k_feat1, (1, seq1, _BERT_DIM), jnp.float32),
        jax.random.normal(k_feat2, (1, seq2, _BERT_DIM), jnp.float32),
    ]

    logits_list = model.forward(feats)
    logits_list = [jax.block_until_ready(l) for l in logits_list]

    # Sanity check against a pure-JAX f32 reference (kernel uses bf16 matmul inputs
    # with f32 accumulation, so tolerances are loosened accordingly).
    for feat, logit in zip(feats, logits_list):
        ref = _reference_head(feat[0], model.w1, model.b1, model.w2, model.b2)
        assert logit.shape == (1, feat.shape[1], n_classes_output)
        assert jnp.allclose(logit[0], ref, atol=2e-2, rtol=2e-2), (
            float(jnp.max(jnp.abs(logit[0] - ref))))

    print("KERNEL_OK")
</pallas_src>

<mosaic_0001>
module attributes {stable_mosaic.version = 11 : i64} {
  func.func @_mlp_head_kernel(%arg0: i32, %arg1: memref<64x768xbf16, #tpu.memory_space<vmem>>, %arg2: memref<768x128xbf16, #tpu.memory_space<vmem>>, %arg3: memref<1x128xf32, #tpu.memory_space<vmem>>, %arg4: memref<128x128xbf16, #tpu.memory_space<vmem>>, %arg5: memref<1x128xf32, #tpu.memory_space<vmem>>, %arg6: memref<64x128xf32, #tpu.memory_space<vmem>>) attributes {dimension_semantics = [#tpu.dimension_semantics<parallel>], iteration_bounds = array<i64: 2>, scalar_prefetch = 0 : i64, scratch_operands = 0 : i64, tpu.core_type = #tpu.core_type<tc>, window_params = [{transform_indices = @transform_0, window_bounds = array<i64: 64, 768>}, {pipeline_mode = #tpu.pipeline_mode<synchronous>, transform_indices = @transform_1, window_bounds = array<i64: 768, 128>}, {pipeline_mode = #tpu.pipeline_mode<synchronous>, transform_indices = @transform_2, window_bounds = array<i64: 1, 128>}, {pipeline_mode = #tpu.pipeline_mode<synchronous>, transform_indices = @transform_3, window_bounds = array<i64: 128, 128>}, {pipeline_mode = #tpu.pipeline_mode<synchronous>, transform_indices = @transform_4, window_bounds = array<i64: 1, 128>}, {transform_indices = @transform_5, window_bounds = array<i64: 64, 128>}]} {
    %c0 = arith.constant 0 : index
    %c0_0 = arith.constant 0 : index
    %0 = vector.load %arg1[%c0, %c0_0] : memref<64x768xbf16, #tpu.memory_space<vmem>>, vector<64x768xbf16>
    %c0_1 = arith.constant 0 : index
    %c0_2 = arith.constant 0 : index
    %1 = vector.load %arg2[%c0_1, %c0_2] : memref<768x128xbf16, #tpu.memory_space<vmem>>, vector<768x128xbf16>
    %cst = arith.constant dense<0.000000e+00> : vector<64x128xf32>
    %2 = tpu.matmul %0, %1, %cst {dimension_numbers = #tpu.dot_dimension_numbers<[1], [0], [0], [1], [0, 0, 1, 1], [], []>} : vector<64x768xbf16>, vector<768x128xbf16>, vector<64x128xf32> -> vector<64x128xf32>
    %c0_3 = arith.constant 0 : index
    %c0_4 = arith.constant 0 : index
    %3 = vector.load %arg3[%c0_3, %c0_4] : memref<1x128xf32, #tpu.memory_space<vmem>>, vector<1x128xf32>
    %4 = vector.broadcast %3 : vector<1x128xf32> to vector<64x128xf32>
    %5 = arith.addf %2, %4 : vector<64x128xf32>
    %cst_5 = arith.constant 0.000000e+00 : f32
    %6 = vector.broadcast %cst_5 : f32 to vector<64x128xf32>
    %7 = arith.maximumf %5, %6 : vector<64x128xf32>
    %8 = arith.truncf %7 : vector<64x128xf32> to vector<64x128xbf16>
    %c0_6 = arith.constant 0 : index
    %c0_7 = arith.constant 0 : index
    %9 = vector.load %arg4[%c0_6, %c0_7] : memref<128x128xbf16, #tpu.memory_space<vmem>>, vector<128x128xbf16>
    %cst_8 = arith.constant dense<0.000000e+00> : vector<64x128xf32>
    %10 = tpu.matmul %8, %9, %cst_8 {dimension_numbers = #tpu.dot_dimension_numbers<[1], [0], [0], [1], [0, 0, 1, 1], [], []>} : vector<64x128xbf16>, vector<128x128xbf16>, vector<64x128xf32> -> vector<64x128xf32>
    %c0_9 = arith.constant 0 : index
    %c0_10 = arith.constant 0 : index
    %11 = vector.load %arg5[%c0_9, %c0_10] : memref<1x128xf32, #tpu.memory_space<vmem>>, vector<1x128xf32>
    %12 = vector.broadcast %11 : vector<1x128xf32> to vector<64x128xf32>
    %13 = arith.addf %10, %12 : vector<64x128xf32>
    %c0_11 = arith.constant 0 : index
    %c0_12 = arith.constant 0 : index
    %14 = vector.load %arg6[%c0_11, %c0_12] : memref<64x128xf32, #tpu.memory_space<vmem>>, vector<64x128xf32>
    tpu.vector_store %arg6[%c0_11, %c0_12], %13 {strides = array<i32>} : memref<64x128xf32, #tpu.memory_space<vmem>>, vector<64x128xf32>,
    return
  }
  func.func @transform_0(%arg0: i32) -> (i32, i32) {
    %c0_i32 = arith.constant 0 : i32
    %c0_i32_0 = arith.constant 0 : i32
    return %arg0, %c0_i32 : i32, i32
  }
  func.func @transform_1(%arg0: i32) -> (i32, i32) {
    %c0_i32 = arith.constant 0 : i32
    %c0_i32_0 = arith.constant 0 : i32
    %c0_i32_1 = arith.constant 0 : i32
    return %c0_i32, %c0_i32_0 : i32, i32
  }
  func.func @transform_2(%arg0: i32) -> (i32, i32) {
    %c0_i32 = arith.constant 0 : i32
    %c0_i32_0 = arith.constant 0 : i32
    %c0_i32_1 = arith.constant 0 : i32
    return %c0_i32, %c0_i32_0 : i32, i32
  }
  func.func @transform_3(%arg0: i32) -> (i32, i32) {
    %c0_i32 = arith.constant 0 : i32
    %c0_i32_0 = arith.constant 0 : i32
    %c0_i32_1 = arith.constant 0 : i32
    return %c0_i32, %c0_i32_0 : i32, i32
  }
  func.func @transform_4(%arg0: i32) -> (i32, i32) {
    %c0_i32 = arith.constant 0 : i32
    %c0_i32_0 = arith.constant 0 : i32
    %c0_i32_1 = arith.constant 0 : i32
    return %c0_i32, %c0_i32_0 : i32, i32
  }
  func.func @transform_5(%arg0: i32) -> (i32, i32) {
    %c0_i32 = arith.constant 0 : i32
    %c0_i32_0 = arith.constant 0 : i32
    return %arg0, %c0_i32 : i32, i32
  }
}

</mosaic_0001>

<llo_original>
// kernel: bert_crf_head.1
$region0: #{bert_crf_head.1}
  #allocation0 [shape = 'u32[]', space=smem, size = 0x4, offset = 0x4, fixed_abs, tag = 'smem constant byte address 0x4 - core index']
  #allocation1 [shape = 'u32[144,128]{1,0:T(1,128)}', space=vmem, size = 0x12000, scoped, tag = 'internal scratch']
  %s0 = inlined_call_operand.vmem [shape: bf16[128,768], index: 0, kind: input, shape index: {}]
  %s1 = inlined_call_operand.vmem [shape: bf16[768,128], index: 1, kind: input, shape index: {}]
  %s2 = inlined_call_operand.vmem [shape: f32[1,128], index: 2, kind: input, shape index: {}]
  %s3 = inlined_call_operand.vmem [shape: bf16[128,128], index: 3, kind: input, shape index: {}]
  %s4 = inlined_call_operand.vmem [shape: f32[1,128], index: 4, kind: input, shape index: {}]
  %s5 = inlined_call_operand.vmem [shape: f32[128,128], index: 5, kind: output, shape index: {}]
  %s6 = sld [smem:[#allocation0]]
  $region53: #{bert_crf_head.1} parent=0
    _
  %s8 = ssub.s32 1, %s6
  %s9 = scalar_select 0, %s8, %s6
  loop: start=0, step=1, limit=4
  $region2: #{bert_crf_head.1} parent=0 // loop_pre_header
    _
  $region3: #{bert_crf_head.1} parent=0 // loop_header
    %s11 = sphi 0, %s15
    %p12 = scmp.ge.s32.totalorder %s11, 4
    %s21 = sphi 0, %s23
    %s24 = sphi 0, %s21
    %s25 = sphi 0, %s24
    %s41 = sphi 0, %s25
    %s45 = sphi 0, %s45
    %s47 = sphi 0, %s45
    %s48 = sphi 0, %s47
    %s62 = sphi 0, %s48
    %s66 = sphi 0, %s66
    %s68 = sphi 0, %s66
    %s69 = sphi 0, %s68
    %s83 = sphi 0, %s69
    %s87 = sphi 0, %s87
    %s89 = sphi 0, %s87
    %s90 = sphi 0, %s89
    %s104 = sphi 0, %s90
    %s108 = sphi 0, %s108
    %s110 = sphi 0, %s108
    %s111 = sphi 0, %s110
    %s125 = sphi 0, %s111
    %s131 = sphi 0, %s133
    %s134 = sphi 0, %s131
    %s135 = sphi 0, %s134
    %s151 = sphi 0, %s135
  $region4: #{bert_crf_head.1} parent=0 // loop_header_branch
    %14 = sbr.rel (%p12) target = $region8
  $region5: #{bert_crf_head.1} parent=0 // loop_body
    %s16 = ssub.s32 %s11, 1
    %s17 = ssub.s32 %s11, 2
    %s18 = sadd.s32 %s11, 1
    %s19 = ssub.s32 %s11, %s18
    %p20 = scmp.eq.s32.totalorder %s19, 0
    %s22 = sadd.s32 %s21, 1
    %s23 = scalar_select %p20, %s21, %s22
    %p26 = pneg %p20
    %p27 = scmp.eq.s32.totalorder %s11, 1
    %p28 = por %p26, %p27
    %p29 = scmp.ne.s32.totalorder %s21, %s24
    %p30 = scmp.eq.s32.totalorder %s11, 0
    %p31 = por %p29, %p30
    %p32 = scmp.ne.s32.totalorder %s21, %s24
    %p33 = scmp.eq.s32.totalorder %s16, 1
    %p34 = por %p32, %p33
    %p35 = scmp.ne.s32.totalorder %s24, %s25
    %p36 = scmp.eq.s32.totalorder %s16, 0
    %p37 = por %p35, %p36
    %p38 = scmp.ne.s32.totalorder %s24, %s25
    %p39 = scmp.eq.s32.totalorder %s17, 1
    %p40 = por %p38, %p39
    %p42 = scmp.ne.s32.totalorder %s25, %s41
    %p43 = scmp.eq.s32.totalorder %s17, 0
    %p44 = por %p42, %p43
    %s46 = sadd.s32 %s45, 1
    %p49 = scmp.eq.s32.totalorder %s11, 1
    %p50 = scmp.ne.s32.totalorder %s45, %s47
    %p51 = scmp.eq.s32.totalorder %s11, 0
    %p52 = por %p50, %p51
    %p53 = scmp.ne.s32.totalorder %s45, %s47
    %p54 = scmp.eq.s32.totalorder %s16, 1
    %p55 = por %p53, %p54
    %p56 = scmp.ne.s32.totalorder %s47, %s48
    %p57 = scmp.eq.s32.totalorder %s16, 0
    %p58 = por %p56, %p57
    %p59 = scmp.ne.s32.totalorder %s47, %s48
    %p60 = scmp.eq.s32.totalorder %s17, 1
    %p61 = por %p59, %p60
    %p63 = scmp.ne.s32.totalorder %s48, %s62
    %p64 = scmp.eq.s32.totalorder %s17, 0
    %p65 = por %p63, %p64
    %s67 = sadd.s32 %s66, 1
    %p70 = scmp.eq.s32.totalorder %s11, 1
    %p71 = scmp.ne.s32.totalorder %s66, %s68
    %p72 = scmp.eq.s32.totalorder %s11, 0
    %p73 = por %p71, %p72
    %p74 = scmp.ne.s32.totalorder %s66, %s68
    %p75 = scmp.eq.s32.totalorder %s16, 1
    %p76 = por %p74, %p75
    %p77 = scmp.ne.s32.totalorder %s68, %s69
    %p78 = scmp.eq.s32.totalorder %s16, 0
    %p79 = por %p77, %p78
    %p80 = scmp.ne.s32.totalorder %s68, %s69
    %p81 = scmp.eq.s32.totalorder %s17, 1
    %p82 = por %p80, %p81
    %p84 = scmp.ne.s32.totalorder %s69, %s83
    %p85 = scmp.eq.s32.totalorder %s17, 0
    %p86 = por %p84, %p85
    %s88 = sadd.s32 %s87, 1
    %p91 = scmp.eq.s32.totalorder %s11, 1
    %p92 = scmp.ne.s32.totalorder %s87, %s89
    %p93 = scmp.eq.s32.totalorder %s11, 0
    %p94 = por %p92, %p93
    %p95 = scmp.ne.s32.totalorder %s87, %s89
    %p96 = scmp.eq.s32.totalorder %s16, 1
    %p97 = por %p95, %p96
    %p98 = scmp.ne.s32.totalorder %s89, %s90
    %p99 = scmp.eq.s32.totalorder %s16, 0
    %p100 = por %p98, %p99
    %p101 = scmp.ne.s32.totalorder %s89, %s90
    %p102 = scmp.eq.s32.totalorder %s17, 1
    %p103 = por %p101, %p102
    %p105 = scmp.ne.s32.totalorder %s90, %s104
    %p106 = scmp.eq.s32.totalorder %s17, 0
    %p107 = por %p105, %p106
    %s109 = sadd.s32 %s108, 1
    %p112 = scmp.eq.s32.totalorder %s11, 1
    %p113 = scmp.ne.s32.totalorder %s108, %s110
    %p114 = scmp.eq.s32.totalorder %s11, 0
    %p115 = por %p113, %p114
    %p116 = scmp.ne.s32.totalorder %s108, %s110
    %p117 = scmp.eq.s32.totalorder %s16, 1
    %p118 = por %p116, %p117
    %p119 = scmp.ne.s32.totalorder %s110, %s111
    %p120 = scmp.eq.s32.totalorder %s16, 0
    %p121 = por %p119, %p120
    %p122 = scmp.ne.s32.totalorder %s110, %s111
    %p123 = scmp.eq.s32.totalorder %s17, 1
    %p124 = por %p122, %p123
    %p126 = scmp.ne.s32.totalorder %s111, %s125
    %p127 = scmp.eq.s32.totalorder %s17, 0
    %p128 = por %p126, %p127
    %s129 = ssub.s32 %s11, %s18
    %p130 = scmp.eq.s32.totalorder %s129, 0
    %s132 = sadd.s32 %s131, 1
    %s133 = scalar_select %p130, %s131, %s132
    %p136 = pneg %p130
    %p137 = scmp.eq.s32.totalorder %s11, 1
    %p138 = por %p136, %p137
    %p139 = scmp.ne.s32.totalorder %s131, %s134
    %p140 = scmp.eq.s32.totalorder %s11, 0
    %p141 = por %p139, %p140
    %p142 = scmp.ne.s32.totalorder %s131, %s134
    %p143 = scmp.eq.s32.totalorder %s16, 1
    %p144 = por %p142, %p143
    %p145 = scmp.ne.s32.totalorder %s134, %s135
    %p146 = scmp.eq.s32.totalorder %s16, 0
    %p147 = por %p145, %p146
    %p148 = scmp.ne.s32.totalorder %s134, %s135
    %p149 = scmp.eq.s32.totalorder %s17, 1
    %p150 = por %p148, %p149
    %p152 = scmp.ne.s32.totalorder %s135, %s151
    %p153 = scmp.eq.s32.totalorder %s17, 0
    %p154 = por %p152, %p153
    %p155 = scmp.le.s32.totalorder 1, %s11
    %p156 = scmp.lt.s32.totalorder %s11, 3
    %p157 = pnand %p155, %p156
    %p158 = pneg %p157
    // Predicated region
    $region9: #{bert_crf_head.1} parent=5 // pred_check
      _
    $region10: #{bert_crf_head.1} parent=5 // pred_check_branch
      %160 = sbr.rel (%p157) target = $region12
    $region11: #{bert_crf_head.1} parent=5 // pred_region
      %s161 = ssub.s32 %s11, 1
      // Predicated region
      $region13: #{bert_crf_head.1} parent=11 // pred_check
        %p162 = pneg %p58
      $region14: #{bert_crf_head.1} parent=11 // pred_check_branch
        %164 = sbr.rel (%p162) target = $region16
      $region15: #{bert_crf_head.1} parent=11 // pred_region
        _
      $region16: #{bert_crf_head.1} parent=11 // pred_fallthru
        _
      // Predicated region
      $region17: #{bert_crf_head.1} parent=11 // pred_check
        %p165 = pneg %p79
      $region18: #{bert_crf_head.1} parent=11 // pred_check_branch
        %167 = sbr.rel (%p165) target = $region20
      $region19: #{bert_crf_head.1} parent=11 // pred_region
        _
      $region20: #{bert_crf_head.1} parent=11 // pred_fallthru
        _
      // Predicated region
      $region21: #{bert_crf_head.1} parent=11 // pred_check
        %p168 = pneg %p100
      $region22: #{bert_crf_head.1} parent=11 // pred_check_branch
        %170 = sbr.rel (%p168) target = $region24
      $region23: #{bert_crf_head.1} parent=11 // pred_region
        _
      $region24: #{bert_crf_head.1} parent=11 // pred_fallthru
        _
      // Predicated region
      $region25: #{bert_crf_head.1} parent=11 // pred_check
        %p171 = pneg %p121
      $region26: #{bert_crf_head.1} parent=11 // pred_check_branch
        %173 = sbr.rel (%p171) target = $region28
      $region27: #{bert_crf_head.1} parent=11 // pred_region
        _
      $region28: #{bert_crf_head.1} parent=11 // pred_fallthru
        _
    $region12: #{bert_crf_head.1} parent=5 // pred_fallthru
      _
    %p174 = scmp.lt.s32.totalorder %s11, 2
    // Predicated region
    $region29: #{bert_crf_head.1} parent=5 // pred_check
      %p175 = pneg %p174
    $region30: #{bert_crf_head.1} parent=5 // pred_check_branch
      %177 = sbr.rel (%p175) target = $region32
    $region31: #{bert_crf_head.1} parent=5 // pred_region
      // Predicated region
      $region33: #{bert_crf_head.1} parent=31 // pred_check
        %p178 = pneg %p31
      $region34: #{bert_crf_head.1} parent=31 // pred_check_branch
        %180 = sbr.rel (%p178) target = $region36
      $region35: #{bert_crf_head.1} parent=31 // pred_region
        %s181 = smul.u32 8, %s11
        %p182 = scmp.lt.s32.totalorder %s181, 15
        %s183 = scalar_select %p182, %s181, 15
        %s184 = smul.addr %s183, 6
        %s185 = smul.addr %s184, 4
        %s186 = scalar_lea.vmem %s0, %s185
        %s187 = smul.u32 8, %s11
      $region36: #{bert_crf_head.1} parent=31 // pred_fallthru
        _
    $region32: #{bert_crf_head.1} parent=5 // pred_fallthru
      _
    %p188 = scmp.le.s32.totalorder 1, %s11
    %p189 = scmp.lt.s32.totalorder %s11, 3
    %p190 = pnand %p188, %p189
    %p191 = pneg %p190
    // Predicated region
    $region37: #{bert_crf_head.1} parent=5 // pred_check
      _
    $region38: #{bert_crf_head.1} parent=5 // pred_check_branch
      %193 = sbr.rel (%p190) target = $region40
    $region39: #{bert_crf_head.1} parent=5 // pred_region
      %s194 = ssub.s32 %s11, 1
      %s195 = smul.u32 8, %s16
      %p196 = scmp.lt.s32.totalorder %s195, 15
      %s197 = scalar_select %p196, %s195, 15
      %s198 = smul.addr %s197, 6
      %s199 = smul.addr %s198, 4
      %s200 = scalar_lea.vmem %s0, %s199
      %p201 = pneg %p37
      %p202 = pneg %p34
      %p203 = pneg %p58
      %p204 = pneg %p55
      %p205 = pneg %p79
      %p206 = pneg %p76
      %p207 = pneg %p100
      %p208 = pneg %p97
      %p209 = pneg %p121
      %p210 = pneg %p118
      %p211 = pneg %p147
      %p212 = pneg %p144
      %s213 = smul.u32 8, %s16
      %p214 = scmp.lt.s32.totalorder %s213, 15
      %s215 = scalar_select %p214, %s213, 15
      %s216 = smul.addr %s215, 8
      %s217 = scalar_lea.vmem %s5, %s216
      %s218 = smul.u32 8, %s16
      %p219 = scmp.lt.s32.totalorder %s218, 15
      %s220 = scalar_select %p219, %s218, 15
      %s221 = smul.addr %s220, 6
      %s222 = smul.addr %s221, 4
      %s223 = scalar_lea.vmem %s0, %s222
      %s224 = smul.u32 8, %s16
      %s225 = smul.u32 8, %s16
      %p226 = scmp.lt.s32.totalorder %s225, 15
      %s227 = scalar_select %p226, %s225, 15
      %s228 = smul.addr %s227, 8
      %s229 = scalar_lea.vmem %s5, %s228
      %s230 = smul.u32 8, %s16
      %v232 = vld [vmem:[%s223] sm:$0xff]
      %v233 = vld [vmem:[%s223 + $0x8] sm:$0xff]
      %v234 = vld [vmem:[%s223 + $0x10] sm:$0xff]
      %v235 = vld [vmem:[%s223 + $0x18] sm:$0xff]
      %v236 = vld [vmem:[%s223 + $0x20] sm:$0xff]
      %v237 = vld [vmem:[%s223 + $0x28] sm:$0xff]
      %v238 = vld [vmem:[%s223 + $0x30] sm:$0xff]
      %v239 = vld [vmem:[%s223 + $0x38] sm:$0xff]
      %v240 = vld [vmem:[%s223 + $0x40] sm:$0xff]
      %v241 = vld [vmem:[%s223 + $0x48] sm:$0xff]
      %v242 = vld [vmem:[%s223 + $0x50] sm:$0xff]
      %v243 = vld [vmem:[%s223 + $0x58] sm:$0xff]
      %v244 = vld [vmem:[%s223 + $0x60] sm:$0xff]
      %v245 = vld [vmem:[%s223 + $0x68] sm:$0xff]
      %v246 = vld [vmem:[%s223 + $0x70] sm:$0xff]
      %v247 = vld [vmem:[%s223 + $0x78] sm:$0xff]
      %v248 = vld [vmem:[%s223 + $0x80] sm:$0xff]
      %v249 = vld [vmem:[%s223 + $0x88] sm:$0xff]
      %v250 = vld [vmem:[%s223 + $0x90] sm:$0xff]
      %v251 = vld [vmem:[%s223 + $0x98] sm:$0xff]
      %v252 = vld [vmem:[%s223 + $0xa0] sm:$0xff]
      %v253 = vld [vmem:[%s223 + $0xa8] sm:$0xff]
      %v254 = vld [vmem:[%s223 + $0xb0] sm:$0xff]
      %v255 = vld [vmem:[%s223 + $0xb8] sm:$0xff]
      %v256 = vld [vmem:[%s1] sm:$0xf]
      %v257 = vld [vmem:[%s1 + $0x4] sm:$0xf]
      %v258 = vld [vmem:[%s1 + $0x8] sm:$0xf]
      %v259 = vld [vmem:[%s1 + $0xc] sm:$0xf]
      %v260 = vld [vmem:[%s1 + $0x10] sm:$0xf]
      %v261 = vld [vmem:[%s1 + $0x14] sm:$0xf]
      %v262 = vld [vmem:[%s1 + $0x18] sm:$0xf]
      %v263 = vld [vmem:[%s1 + $0x1c] sm:$0xf]
      %v264 = vld [vmem:[%s1 + $0x20] sm:$0xf]
      %v265 = vld [vmem:[%s1 + $0x24] sm:$0xf]
      %v266 = vld [vmem:[%s1 + $0x28] sm:$0xf]
      %v267 = vld [vmem:[%s1 + $0x2c] sm:$0xf]
      %v268 = vld [vmem:[%s1 + $0x30] sm:$0xf]
      %v269 = vld [vmem:[%s1 + $0x34] sm:$0xf]
      %v270 = vld [vmem:[%s1 + $0x38] sm:$0xf]
      %v271 = vld [vmem:[%s1 + $0x3c] sm:$0xf]
      %v272 = vld [vmem:[%s1 + $0x40] sm:$0xf]
      %v273 = vld [vmem:[%s1 + $0x44] sm:$0xf]
      %v274 = vld [vmem:[%s1 + $0x48] sm:$0xf]
      %v275 = vld [vmem:[%s1 + $0x4c] sm:$0xf]
      %v276 = vld [vmem:[%s1 + $0x50] sm:$0xf]
      %v277 = vld [vmem:[%s1 + $0x54] sm:$0xf]
      %v278 = vld [vmem:[%s1 + $0x58] sm:$0xf]
      %v279 = vld [vmem:[%s1 + $0x5c] sm:$0xf]
      %v280 = vld [vmem:[%s1 + $0x60] sm:$0xf]
      %v281 = vld [vmem:[%s1 + $0x64] sm:$0xf]
      %v282 = vld [vmem:[%s1 + $0x68] sm:$0xf]
      %v283 = vld [vmem:[%s1 + $0x6c] sm:$0xf]
      %v284 = vld [vmem:[%s1 + $0x70] sm:$0xf]
      %v285 = vld [vmem:[%s1 + $0x74] sm:$0xf]
      %v286 = vld [vmem:[%s1 + $0x78] sm:$0xf]
      %v287 = vld [vmem:[%s1 + $0x7c] sm:$0xf]
      %v288 = vld [vmem:[%s1 + $0x80] sm:$0xf]
      %v289 = vld [vmem:[%s1 + $0x84] sm:$0xf]
      %v290 = vld [vmem:[%s1 + $0x88] sm:$0xf]
      %v291 = vld [vmem:[%s1 + $0x8c] sm:$0xf]
      %v292 = vld [vmem:[%s1 + $0x90] sm:$0xf]
      %v293 = vld [vmem:[%s1 + $0x94] sm:$0xf]
      %v294 = vld [vmem:[%s1 + $0x98] sm:$0xf]
      %v295 = vld [vmem:[%s1 + $0x9c] sm:$0xf]
      %v296 = vld [vmem:[%s1 + $0xa0] sm:$0xf]
      %v297 = vld [vmem:[%s1 + $0xa4] sm:$0xf]
      %v298 = vld [vmem:[%s1 + $0xa8] sm:$0xf]
      %v299 = vld [vmem:[%s1 + $0xac] sm:$0xf]
      %v300 = vld [vmem:[%s1 + $0xb0] sm:$0xf]
      %v301 = vld [vmem:[%s1 + $0xb4] sm:$0xf]
      %v302 = vld [vmem:[%s1 + $0xb8] sm:$0xf]
      %v303 = vld [vmem:[%s1 + $0xbc] sm:$0xf]
      %v304 = vld [vmem:[%s1 + $0xc0] sm:$0xf]
      %v305 = vld [vmem:[%s1 + $0xc4] sm:$0xf]
      %v306 = vld [vmem:[%s1 + $0xc8] sm:$0xf]
      %v307 = vld [vmem:[%s1 + $0xcc] sm:$0xf]
      %v308 = vld [vmem:[%s1 + $0xd0] sm:$0xf]
      %v309 = vld [vmem:[%s1 + $0xd4] sm:$0xf]
      %v310 = vld [vmem:[%s1 + $0xd8] sm:$0xf]
      %v311 = vld [vmem:[%s1 + $0xdc] sm:$0xf]
      %v312 = vld [vmem:[%s1 + $0xe0] sm:$0xf]
      %v313 = vld [vmem:[%s1 + $0xe4] sm:$0xf]
      %v314 = vld [vmem:[%s1 + $0xe8] sm:$0xf]
      %v315 = vld [vmem:[%s1 + $0xec] sm:$0xf]
      %v316 = vld [vmem:[%s1 + $0xf0] sm:$0xf]
      %v317 = vld [vmem:[%s1 + $0xf4] sm:$0xf]
      %v318 = vld [vmem:[%s1 + $0xf8] sm:$0xf]
      %v319 = vld [vmem:[%s1 + $0xfc] sm:$0xf]
      %v320 = vld [vmem:[%s1 + $0x100] sm:$0xf]
      %v321 = vld [vmem:[%s1 + $0x104] sm:$0xf]
      %v322 = vld [vmem:[%s1 + $0x108] sm:$0xf]
      %v323 = vld [vmem:[%s1 + $0x10c] sm:$0xf]
      %v324 = vld [vmem:[%s1 + $0x110] sm:$0xf]
      %v325 = vld [vmem:[%s1 + $0x114] sm:$0xf]
      %v326 = vld [vmem:[%s1 + $0x118] sm:$0xf]
      %v327 = vld [vmem:[%s1 + $0x11c] sm:$0xf]
      %v328 = vld [vmem:[%s1 + $0x120] sm:$0xf]
      %v329 = vld [vmem:[%s1 + $0x124] sm:$0xf]
      %v330 = vld [vmem:[%s1 + $0x128] sm:$0xf]
      %v331 = vld [vmem:[%s1 + $0x12c] sm:$0xf]
      %v332 = vld [vmem:[%s1 + $0x130] sm:$0xf]
      %v333 = vld [vmem:[%s1 + $0x134] sm:$0xf]
      %v334 = vld [vmem:[%s1 + $0x138] sm:$0xf]
      %v335 = vld [vmem:[%s1 + $0x13c] sm:$0xf]
      %v336 = vld [vmem:[%s1 + $0x140] sm:$0xf]
      %v337 = vld [vmem:[%s1 + $0x144] sm:$0xf]
      %v338 = vld [vmem:[%s1 + $0x148] sm:$0xf]
      %v339 = vld [vmem:[%s1 + $0x14c] sm:$0xf]
      %v340 = vld [vmem:[%s1 + $0x150] sm:$0xf]
      %v341 = vld [vmem:[%s1 + $0x154] sm:$0xf]
      %v342 = vld [vmem:[%s1 + $0x158] sm:$0xf]
      %v343 = vld [vmem:[%s1 + $0x15c] sm:$0xf]
      %v344 = vld [vmem:[%s1 + $0x160] sm:$0xf]
      %v345 = vld [vmem:[%s1 + $0x164] sm:$0xf]
      %v346 = vld [vmem:[%s1 + $0x168] sm:$0xf]
      %v347 = vld [vmem:[%s1 + $0x16c] sm:$0xf]
      %v348 = vld [vmem:[%s1 + $0x170] sm:$0xf]
      %v349 = vld [vmem:[%s1 + $0x174] sm:$0xf]
      %v350 = vld [vmem:[%s1 + $0x178] sm:$0xf]
      %v351 = vld [vmem:[%s1 + $0x17c] sm:$0xf]
      %v352 = vld [vmem:[%s2] sm:$0x1]
      %v354 = vlaneseq
      %v355 = vshrl.u32 %v354, 7
      %v356 = vsub.s32 0, %v355
      %v357 = vrot.slane %v352, %v356
      %v383 = vunpack.c.l.b16 %v232
      %v384 = vunpack.c.h.b16 %v232
      %v385 = vunpack.c.l.b16 %v233
      %v386 = vunpack.c.h.b16 %v233
      %v387 = vunpack.c.l.b16 %v234
      %v388 = vunpack.c.h.b16 %v234
      %v389 = vunpack.c.l.b16 %v235
      %v390 = vunpack.c.h.b16 %v235
      %v391 = vunpack.c.l.b16 %v236
      %v392 = vunpack.c.h.b16 %v236
      %v393 = vunpack.c.l.b16 %v237
      %v394 = vunpack.c.h.b16 %v237
      %v395 = vunpack.c.l.b16 %v238
      %v396 = vunpack.c.h.b16 %v238
      %v397 = vunpack.c.l.b16 %v239
      %v398 = vunpack.c.h.b16 %v239
      %v399 = vunpack.c.l.b16 %v240
      %v400 = vunpack.c.h.b16 %v240
      %v401 = vunpack.c.l.b16 %v241
      %v402 = vunpack.c.h.b16 %v241
      %v403 = vunpack.c.l.b16 %v242
      %v404 = vunpack.c.h.b16 %v242
      %v405 = vunpack.c.l.b16 %v243
      %v406 = vunpack.c.h.b16 %v243
      %v407 = vunpack.c.l.b16 %v244
      %v408 = vunpack.c.h.b16 %v244
      %v409 = vunpack.c.l.b16 %v245
      %v410 = vunpack.c.h.b16 %v245
      %v411 = vunpack.c.l.b16 %v246
      %v412 = vunpack.c.h.b16 %v246
      %v413 = vunpack.c.l.b16 %v247
      %v414 = vunpack.c.h.b16 %v247
      %v415 = vunpack.c.l.b16 %v248
      %v416 = vunpack.c.h.b16 %v248
      %v417 = vunpack.c.l.b16 %v249
      %v418 = vunpack.c.h.b16 %v249
      %v419 = vunpack.c.l.b16 %v250
      %v420 = vunpack.c.h.b16 %v250
      %v421 = vunpack.c.l.b16 %v251
      %v422 = vunpack.c.h.b16 %v251
      %v423 = vunpack.c.l.b16 %v252
      %v424 = vunpack.c.h.b16 %v252
      %v425 = vunpack.c.l.b16 %v253
      %v426 = vunpack.c.h.b16 %v253
      %v427 = vunpack.c.l.b16 %v254
      %v428 = vunpack.c.h.b16 %v254
      %v429 = vunpack.c.l.b16 %v255
      %v430 = vunpack.c.h.b16 %v255
      %v431 = vpack.c.b16 %v389, %v383
      %v432 = vpack.c.b16 %v390, %v384
      %v433 = vpack.c.b16 %v391, %v385
      %v434 = vpack.c.b16 %v392, %v386
      %v435 = vpack.c.b16 %v393, %v387
      %v436 = vpack.c.b16 %v394, %v388
      %v437 = vpack.c.b16 %v401, %v395
      %v438 = vpack.c.b16 %v402, %v396
      %v439 = vpack.c.b16 %v403, %v397
      %v440 = vpack.c.b16 %v404, %v398
      %v441 = vpack.c.b16 %v405, %v399
      %v442 = vpack.c.b16 %v406, %v400
      %v443 = vpack.c.b16 %v413, %v407
      %v444 = vpack.c.b16 %v414, %v408
      %v445 = vpack.c.b16 %v415, %v409
      %v446 = vpack.c.b16 %v416, %v410
      %v447 = vpack.c.b16 %v417, %v411
      %v448 = vpack.c.b16 %v418, %v412
      %v449 = vpack.c.b16 %v425, %v419
      %v450 = vpack.c.b16 %v426, %v420
      %v451 = vpack.c.b16 %v427, %v421
      %v452 = vpack.c.b16 %v428, %v422
      %v453 = vpack.c.b16 %v429, %v423
      %v454 = vpack.c.b16 %v430, %v424
      %v575 = vunpack.c.l.b16 %v256
      %v576 = vunpack.c.l.b16 %v257
      %v577 = vunpack.c.l.b16 %v258
      %v578 = vunpack.c.l.b16 %v259
      %v579 = vunpack.c.l.b16 %v260
      %v580 = vunpack.c.l.b16 %v261
      %v581 = vunpack.c.l.b16 %v262
      %v582 = vunpack.c.l.b16 %v263
      %v583 = vunpack.c.l.b16 %v264
      %v584 = vunpack.c.l.b16 %v265
      %v585 = vunpack.c.l.b16 %v266
      %v586 = vunpack.c.l.b16 %v267
      %v587 = vunpack.c.l.b16 %v268
      %v588 = vunpack.c.l.b16 %v269
      %v589 = vunpack.c.l.b16 %v270
      %v590 = vunpack.c.l.b16 %v271
      %v591 = vunpack.c.l.b16 %v272
      %v592 = vunpack.c.l.b16 %v273
      %v593 = vunpack.c.l.b16 %v274
      %v594 = vunpack.c.l.b16 %v275
      %v595 = vunpack.c.l.b16 %v276
      %v596 = vunpack.c.l.b16 %v277
      %v597 = vunpack.c.l.b16 %v278
      %v598 = vunpack.c.l.b16 %v279
      %v599 = vunpack.c.l.b16 %v280
      %v600 = vunpack.c.l.b16 %v281
      %v601 = vunpack.c.l.b16 %v282
      %v602 = vunpack.c.l.b16 %v283
      %v603 = vunpack.c.l.b16 %v284
      %v604 = vunpack.c.l.b16 %v285
      %v605 = vunpack.c.l.b16 %v286
      %v606 = vunpack.c.l.b16 %v287
      %v607 = vunpack.c.l.b16 %v288
      %v608 = vunpack.c.l.b16 %v289
      %v609 = vunpack.c.l.b16 %v290
      %v610 = vunpack.c.l.b16 %v291
      %v611 = vunpack.c.l.b16 %v292
      %v612 = vunpack.c.l.b16 %v293
      %v613 = vunpack.c.l.b16 %v294
      %v614 = vunpack.c.l.b16 %v295
      %v615 = vunpack.c.l.b16 %v296
      %v616 = vunpack.c.l.b16 %v297
      %v617 = vunpack.c.l.b16 %v298
      %v618 = vunpack.c.l.b16 %v299
      %v619 = vunpack.c.l.b16 %v300
      %v620 = vunpack.c.l.b16 %v301
      %v621 = vunpack.c.l.b16 %v302
      %v622 = vunpack.c.l.b16 %v303
      %v623 = vunpack.c.l.b16 %v304
      %v624 = vunpack.c.l.b16 %v305
      %v625 = vunpack.c.l.b16 %v306
      %v626 = vunpack.c.l.b16 %v307
      %v627 = vunpack.c.l.b16 %v308
      %v628 = vunpack.c.l.b16 %v309
      %v629 = vunpack.c.l.b16 %v310
      %v630 = vunpack.c.l.b16 %v311
      %v631 = vunpack.c.l.b16 %v312
      %v632 = vunpack.c.l.b16 %v313
      %v633 = vunpack.c.l.b16 %v314
      %v634 = vunpack.c.l.b16 %v315
      %v635 = vunpack.c.l.b16 %v316
      %v636 = vunpack.c.l.b16 %v317
      %v637 = vunpack.c.l.b16 %v318
      %v638 = vunpack.c.l.b16 %v319
      %v639 = vunpack.c.l.b16 %v320
      %v640 = vunpack.c.l.b16 %v321
      %v641 = vunpack.c.l.b16 %v322
      %v642 = vunpack.c.l.b16 %v323
      %v643 = vunpack.c.l.b16 %v324
      %v644 = vunpack.c.l.b16 %v325
      %v645 = vunpack.c.l.b16 %v326
      %v646 = vunpack.c.l.b16 %v327
      %v647 = vunpack.c.l.b16 %v328
      %v648 = vunpack.c.l.b16 %v329
      %v649 = vunpack.c.l.b16 %v330
      %v650 = vunpack.c.l.b16 %v331
      %v651 = vunpack.c.l.b16 %v332
      %v652 = vunpack.c.l.b16 %v333
      %v653 = vunpack.c.l.b16 %v334
      %v654 = vunpack.c.l.b16 %v335
      %v655 = vunpack.c.l.b16 %v336
      %v656 = vunpack.c.l.b16 %v337
      %v657 = vunpack.c.l.b16 %v338
      %v658 = vunpack.c.l.b16 %v339
      %v659 = vunpack.c.l.b16 %v340
      %v660 = vunpack.c.l.b16 %v341
      %v661 = vunpack.c.l.b16 %v342
      %v662 = vunpack.c.l.b16 %v343
      %v663 = vunpack.c.l.b16 %v344
      %v664 = vunpack.c.l.b16 %v345
      %v665 = vunpack.c.l.b16 %v346
      %v666 = vunpack.c.l.b16 %v347
      %v667 = vunpack.c.l.b16 %v348
      %v668 = vunpack.c.l.b16 %v349
      %v669 = vunpack.c.l.b16 %v350
      %v670 = vunpack.c.l.b16 %v351
      %v671 = vpack.c.b16 %v576, %v575
      %v672 = vpack.c.b16 %v578, %v577
      %v673 = vpack.c.b16 %v580, %v579
      %v674 = vpack.c.b16 %v582, %v581
      %v675 = vpack.c.b16 %v584, %v583
      %v676 = vpack.c.b16 %v586, %v585
      %v677 = vpack.c.b16 %v588, %v587
      %v678 = vpack.c.b16 %v590, %v589
      %v679 = vpack.c.b16 %v592, %v591
      %v680 = vpack.c.b16 %v594, %v593
      %v681 = vpack.c.b16 %v596, %v595
      %v682 = vpack.c.b16 %v598, %v597
      %v683 = vpack.c.b16 %v600, %v599
      %v684 = vpack.c.b16 %v602, %v601
      %v685 = vpack.c.b16 %v604, %v603
      %v686 = vpack.c.b16 %v606, %v605
      %v687 = vpack.c.b16 %v608, %v607
      %v688 = vpack.c.b16 %v610, %v609
      %v689 = vpack.c.b16 %v612, %v611
      %v690 = vpack.c.b16 %v614, %v613
      %v691 = vpack.c.b16 %v616, %v615
      %v692 = vpack.c.b16 %v618, %v617
      %v693 = vpack.c.b16 %v620, %v619
      %v694 = vpack.c.b16 %v622, %v621
      %v695 = vpack.c.b16 %v624, %v623
      %v696 = vpack.c.b16 %v626, %v625
      %v697 = vpack.c.b16 %v628, %v627
      %v698 = vpack.c.b16 %v630, %v629
      %v699 = vpack.c.b16 %v632, %v631
      %v700 = vpack.c.b16 %v634, %v633
      %v701 = vpack.c.b16 %v636, %v635
      %v702 = vpack.c.b16 %v638, %v637
      %v703 = vpack.c.b16 %v640, %v639
      %v704 = vpack.c.b16 %v642, %v641
      %v705 = vpack.c.b16 %v644, %v643
      %v706 = vpack.c.b16 %v646, %v645
      %v707 = vpack.c.b16 %v648, %v647
      %v708 = vpack.c.b16 %v650, %v649
      %v709 = vpack.c.b16 %v652, %v651
      %v710 = vpack.c.b16 %v654, %v653
      %v711 = vpack.c.b16 %v656, %v655
      %v712 = vpack.c.b16 %v658, %v657
      %v713 = vpack.c.b16 %v660, %v659
      %v714 = vpack.c.b16 %v662, %v661
      %v715 = vpack.c.b16 %v664, %v663
      %v716 = vpack.c.b16 %v666, %v665
      %v717 = vpack.c.b16 %v668, %v667
      %v718 = vpack.c.b16 %v670, %v669
      %767 = vmatprep.subr.bf16.mxu0 0
      %768 = vmatpush1.bf16.msra.mxu0 %v671
      %769 = vmatprep.subr.bf16.mxu0 0
      %770 = vmatpush1.bf16.msra.mxu0 %v672
      %771 = vmatprep.subr.bf16.mxu0 0
      %772 = vmatpush1.bf16.msra.mxu0 %v673
      %773 = vmatprep.subr.bf16.mxu0 0
      %774 = vmatpush1.bf16.msra.mxu0 %v674
      %775 = vmatprep.subr.bf16.mxu0 0
      %776 = vmatpush1.bf16.msra.mxu0 %v675
      %777 = vmatprep.subr.bf16.mxu0 0
      %778 = vmatpush1.bf16.msra.mxu0 %v676
      %779 = vmatprep.subr.bf16.mxu0 0
      %780 = vmatpush1.bf16.msra.mxu0 %v677
      %781 = vmatprep.subr.bf16.mxu0 0
      %782 = vmatpush1.bf16.msra.mxu0 %v678
      %783 = vmatprep.subr.bf16.mxu0 0
      %784 = vmatpush1.bf16.msra.mxu0 %v679
      %785 = vmatprep.subr.bf16.mxu0 0
      %786 = vmatpush1.bf16.msra.mxu0 %v680
      %787 = vmatprep.subr.bf16.mxu0 0
      %788 = vmatpush1.bf16.msra.mxu0 %v681
      %789 = vmatprep.subr.bf16.mxu0 0
      %790 = vmatpush1.bf16.msra.mxu0 %v682
      %791 = vmatprep.subr.bf16.mxu0 0
      %792 = vmatpush1.bf16.msra.mxu0 %v683
      %793 = vmatprep.subr.bf16.mxu0 0
      %794 = vmatpush1.bf16.msra.mxu0 %v684
      %795 = vmatprep.subr.bf16.mxu0 0
      %796 = vmatpush1.bf16.msra.mxu0 %v685
      %797 = vmatprep.subr.bf16.mxu0 0
      %798 = vmatpush1.bf16.msra.mxu0 %v686
      %799 = vmatprep.mubr.bf16.mxu0 %v432
      %800 = vmatmul.mubr.bf16.gmra.mrb[0].mxu0 %v431
      %v801 = vpop.f32.mrb[0].mxu0
      %v802 = vadd.f32 %v357, %v801
      %v803 = vpop.f32.mrb[0].mxu0
      %v804 = vpop.f32.mrb[0].mxu0
      %v805 = vadd.f32 %v357, %v804
      %v806 = vpop.f32.mrb[0].mxu0
      %807 = vmatprep.mubr.bf16.mxu0 %v438
      %808 = vmatmul.mubr.bf16.gmra.mrb[0].mxu0 %v437
      %v809 = vpop.f32.mrb[0].mxu0
      %v810 = vadd.f32 %v357, %v809
      %v811 = vpop.f32.mrb[0].mxu0
      %v812 = vpop.f32.mrb[0].mxu0
      %v813 = vadd.f32 %v357, %v812
      %v814 = vpop.f32.mrb[0].mxu0
      %815 = vmatprep.mubr.bf16.mxu0 %v444
      %816 = vmatmul.mubr.bf16.gmra.mrb[0].mxu0 %v443
      %v817 = vpop.f32.mrb[0].mxu0
      %v818 = vadd.f32 %v357, %v817
      %v819 = vpop.f32.mrb[0].mxu0
      %v820 = vpop.f32.mrb[0].mxu0
      %v821 = vadd.f32 %v357, %v820
      %v822 = vpop.f32.mrb[0].mxu0
      %823 = vmatprep.mubr.bf16.mxu0 %v450
      %824 = vmatmul.mubr.bf16.gmra.mrb[0].mxu0 %v449
      %v825 = vpop.f32.mrb[0].mxu0
      %v826 = vadd.f32 %v357, %v825
      %v827 = vpop.f32.mrb[0].mxu0
      %v828 = vpop.f32.mrb[0].mxu0
      %v829 = vadd.f32 %v357, %v828
      %v830 = vpop.f32.mrb[0].mxu0
      %831 = vdwg.mxu0
      %832 = vmatprep.subr.bf16.mxu0 0
      %833 = vmatpush1.bf16.msra.mxu0 %v687
      %834 = vmatprep.subr.bf16.mxu0 0
      %835 = vmatpush1.bf16.msra.mxu0 %v688
      %836 = vmatprep.subr.bf16.mxu0 0
      %837 = vmatpush1.bf16.msra.mxu0 %v689
      %838 = vmatprep.subr.bf16.mxu0 0
      %839 = vmatpush1.bf16.msra.mxu0 %v690
      %840 = vmatprep.subr.bf16.mxu0 0
      %841 = vmatpush1.bf16.msra.mxu0 %v691
      %842 = vmatprep.subr.bf16.mxu0 0
      %843 = vmatpush1.bf16.msra.mxu0 %v692
      %844 = vmatprep.subr.bf16.mxu0 0
      %845 = vmatpush1.bf16.msra.mxu0 %v693
      %846 = vmatprep.subr.bf16.mxu0 0
      %847 = vmatpush1.bf16.msra.mxu0 %v694
      %848 = vmatprep.subr.bf16.mxu0 0
      %849 = vmatpush1.bf16.msra.mxu0 %v695
      %850 = vmatprep.subr.bf16.mxu0 0
      %851 = vmatpush1.bf16.msra.mxu0 %v696
      %852 = vmatprep.subr.bf16.mxu0 0
      %853 = vmatpush1.bf16.msra.mxu0 %v697
      %854 = vmatprep.subr.bf16.mxu0 0
      %855 = vmatpush1.bf16.msra.mxu0 %v698
      %856 = vmatprep.subr.bf16.mxu0 0
      %857 = vmatpush1.bf16.msra.mxu0 %v699
      %858 = vmatprep.subr.bf16.mxu0 0
      %859 = vmatpush1.bf16.msra.mxu0 %v700
      %860 = vmatprep.subr.bf16.mxu0 0
      %861 = vmatpush1.bf16.msra.mxu0 %v701
      %862 = vmatprep.subr.bf16.mxu0 0
      %863 = vmatpush1.bf16.msra.mxu0 %v702
      %864 = vmatprep.mubr.bf16.mxu0 %v434
      %865 = vmatmul.mubr.bf16.gmra.mrb[0].mxu0 %v433
      %v866 = vpop.f32.mrb[0].mxu0
      %v867 = vadd.f32 %v802, %v866
      %v868 = vpop.f32.mrb[0].mxu0
      %v869 = vpop.f32.mrb[0].mxu0
      %v870 = vadd.f32 %v805, %v869
      %v871 = vpop.f32.mrb[0].mxu0
      %872 = vmatprep.mubr.bf16.mxu0 %v440
      %873 = vmatmul.mubr.bf16.gmra.mrb[0].mxu0 %v439
      %v874 = vpop.f32.mrb[0].mxu0
      %v875 = vadd.f32 %v810, %v874
      %v876 = vpop.f32.mrb[0].mxu0
      %v877 = vpop.f32.mrb[0].mxu0
      %v878 = vadd.f32 %v813, %v877
      %v879 = vpop.f32.mrb[0].mxu0
      %880 = vmatprep.mubr.bf16.mxu0 %v446
      %881 = vmatmul.mubr.bf16.gmra.mrb[0].mxu0 %v445
      %v882 = vpop.f32.mrb[0].mxu0
      %v883 = vadd.f32 %v818, %v882
      %v884 = vpop.f32.mrb[0].mxu0
      %v885 = vpop.f32.mrb[0].mxu0
      %v886 = vadd.f32 %v821, %v885
      %v887 = vpop.f32.mrb[0].mxu0
      %888 = vmatprep.mubr.bf16.mxu0 %v452
      %889 = vmatmul.mubr.bf16.gmra.mrb[0].mxu0 %v451
      %v890 = vpop.f32.mrb[0].mxu0
      %v891 = vadd.f32 %v826, %v890
      %v892 = vpop.f32.mrb[0].mxu0
      %v893 = vpop.f32.mrb[0].mxu0
      %v894 = vadd.f32 %v829, %v893
      %v895 = vpop.f32.mrb[0].mxu0
      %896 = vdwg.mxu0
      %897 = vmatprep.subr.bf16.mxu0 0
      %898 = vmatpush1.bf16.msra.mxu0 %v703
      %899 = vmatprep.subr.bf16.mxu0 0
      %900 = vmatpush1.bf16.msra.mxu0 %v704
      %901 = vmatprep.subr.bf16.mxu0 0
      %902 = vmatpush1.bf16.msra.mxu0 %v705
      %903 = vmatprep.subr.bf16.mxu0 0
      %904 = vmatpush1.bf16.msra.mxu0 %v706
      %905 = vmatprep.subr.bf16.mxu0 0
      %906 = vmatpush1.bf16.msra.mxu0 %v707
      %907 = vmatprep.subr.bf16.mxu0 0
      %908 = vmatpush1.bf16.msra.mxu0 %v708
      %909 = vmatprep.subr.bf16.mxu0 0
      %910 = vmatpush1.bf16.msra.mxu0 %v709
      %911 = vmatprep.subr.bf16.mxu0 0
      %912 = vmatpush1.bf16.msra.mxu0 %v710
      %913 = vmatprep.subr.bf16.mxu0 0
      %914 = vmatpush1.bf16.msra.mxu0 %v711
      %915 = vmatprep.subr.bf16.mxu0 0
      %916 = vmatpush1.bf16.msra.mxu0 %v712
      %917 = vmatprep.subr.bf16.mxu0 0
      %918 = vmatpush1.bf16.msra.mxu0 %v713
      %919 = vmatprep.subr.bf16.mxu0 0
      %920 = vmatpush1.bf16.msra.mxu0 %v714
      %921 = vmatprep.subr.bf16.mxu0 0
      %922 = vmatpush1.bf16.msra.mxu0 %v715
      %923 = vmatprep.subr.bf16.mxu0 0
      %924 = vmatpush1.bf16.msra.mxu0 %v716
      %925 = vmatprep.subr.bf16.mxu0 0
      %926 = vmatpush1.bf16.msra.mxu0 %v717
      %927 = vmatprep.subr.bf16.mxu0 0
      %928 = vmatpush1.bf16.msra.mxu0 %v718
      %929 = vmatprep.mubr.bf16.mxu0 %v436
      %930 = vmatmul.mubr.bf16.gmra.mrb[0].mxu0 %v435
      %v931 = vpop.f32.mrb[0].mxu0
      %v932 = vadd.f32 %v867, %v931
      %v933 = vpop.f32.mrb[0].mxu0
      %v934 = vpop.f32.mrb[0].mxu0
      %v935 = vadd.f32 %v870, %v934
      %v936 = vpop.f32.mrb[0].mxu0
      %937 = vmatprep.mubr.bf16.mxu0 %v442
      %938 = vmatmul.mubr.bf16.gmra.mrb[0].mxu0 %v441
      %v939 = vpop.f32.mrb[0].mxu0
      %v940 = vadd.f32 %v875, %v939
      %v941 = vpop.f32.mrb[0].mxu0
      %v942 = vpop.f32.mrb[0].mxu0
      %v943 = vadd.f32 %v878, %v942
      %v944 = vpop.f32.mrb[0].mxu0
      %945 = vmatprep.mubr.bf16.mxu0 %v448
      %946 = vmatmul.mubr.bf16.gmra.mrb[0].mxu0 %v447
      %v947 = vpop.f32.mrb[0].mxu0
      %v948 = vadd.f32 %v883, %v947
      %v949 = vpop.f32.mrb[0].mxu0
      %v950 = vpop.f32.mrb[0].mxu0
      %v951 = vadd.f32 %v886, %v950
      %v952 = vpop.f32.mrb[0].mxu0
      %953 = vmatprep.mubr.bf16.mxu0 %v454
      %954 = vmatmul.mubr.bf16.gmra.mrb[0].mxu0 %v453
      %v955 = vpop.f32.mrb[0].mxu0
      %v956 = vadd.f32 %v891, %v955
      %v957 = vpop.f32.mrb[0].mxu0
      %v958 = vpop.f32.mrb[0].mxu0
      %v959 = vadd.f32 %v894, %v958
      %v960 = vpop.f32.mrb[0].mxu0
      %961 = vdwg.mxu0
      %v962 = vmax.f32 %v932, 0.0
      %v963 = vmax.f32 %v935, 0.0
      %v964 = vmax.f32 %v940, 0.0
      %v965 = vmax.f32 %v943, 0.0
      %v966 = vmax.f32 %v948, 0.0
      %v967 = vmax.f32 %v951, 0.0
      %v968 = vmax.f32 %v956, 0.0
      %v969 = vmax.f32 %v959, 0.0
      %v970 = vpack.c.bf16 %v963, %v962
      %v971 = vpack.c.bf16 %v965, %v964
      %v972 = vpack.c.bf16 %v967, %v966
      %v973 = vpack.c.bf16 %v969, %v968
      %v974 = vld [vmem:[%s3] sm:$0xf]
      %v975 = vld [vmem:[%s3 + $0x4] sm:$0xf]
      %v976 = vld [vmem:[%s3 + $0x8] sm:$0xf]
      %v977 = vld [vmem:[%s3 + $0xc] sm:$0xf]
      %v978 = vld [vmem:[%s3 + $0x10] sm:$0xf]
      %v979 = vld [vmem:[%s3 + $0x14] sm:$0xf]
      %v980 = vld [vmem:[%s3 + $0x18] sm:$0xf]
      %v981 = vld [vmem:[%s3 + $0x1c] sm:$0xf]
      %v982 = vld [vmem:[%s3 + $0x20] sm:$0xf]
      %v983 = vld [vmem:[%s3 + $0x24] sm:$0xf]
      %v984 = vld [vmem:[%s3 + $0x28] sm:$0xf]
      %v985 = vld [vmem:[%s3 + $0x2c] sm:$0xf]
      %v986 = vld [vmem:[%s3 + $0x30] sm:$0xf]
      %v987 = vld [vmem:[%s3 + $0x34] sm:$0xf]
      %v988 = vld [vmem:[%s3 + $0x38] sm:$0xf]
      %v989 = vld [vmem:[%s3 + $0x3c] sm:$0xf]
      %v990 = vld [vmem:[%s4] sm:$0x1]
      %v992 = vlaneseq
      %v993 = vshrl.u32 %v992, 7
      %v994 = vsub.s32 0, %v993
      %v995 = vrot.slane %v990, %v994
      %v1013 = vunpack.c.l.b16 %v974
      %v1014 = vunpack.c.l.b16 %v975
      %v1015 = vunpack.c.l.b16 %v976
      %v1016 = vunpack.c.l.b16 %v977
      %v1017 = vunpack.c.l.b16 %v978
      %v1018 = vunpack.c.l.b16 %v979
      %v1019 = vunpack.c.l.b16 %v980
      %v1020 = vunpack.c.l.b16 %v981
      %v1021 = vunpack.c.l.b16 %v982
      %v1022 = vunpack.c.l.b16 %v983
      %v1023 = vunpack.c.l.b16 %v984
      %v1024 = vunpack.c.l.b16 %v985
      %v1025 = vunpack.c.l.b16 %v986
      %v1026 = vunpack.c.l.b16 %v987
      %v1027 = vunpack.c.l.b16 %v988
      %v1028 = vunpack.c.l.b16 %v989
      %v1029 = vpack.c.b16 %v1014, %v1013
      %v1030 = vpack.c.b16 %v1016, %v1015
      %v1031 = vpack.c.b16 %v1018, %v1017
      %v1032 = vpack.c.b16 %v1020, %v1019
      %v1033 = vpack.c.b16 %v1022, %v1021
      %v1034 = vpack.c.b16 %v1024, %v1023
      %v1035 = vpack.c.b16 %v1026, %v1025
      %v1036 = vpack.c.b16 %v1028, %v1027
      %1045 = vmatprep.subr.bf16.mxu0 0
      %1046 = vmatpush1.bf16.msra.mxu0 %v1029
      %1047 = vmatprep.subr.bf16.mxu0 0
      %1048 = vmatpush1.bf16.msra.mxu0 %v1030
      %1049 = vmatprep.subr.bf16.mxu0 0
      %1050 = vmatpush1.bf16.msra.mxu0 %v1031
      %1051 = vmatprep.subr.bf16.mxu0 0
      %1052 = vmatpush1.bf16.msra.mxu0 %v1032
      %1053 = vmatprep.subr.bf16.mxu0 0
      %1054 = vmatpush1.bf16.msra.mxu0 %v1033
      %1055 = vmatprep.subr.bf16.mxu0 0
      %1056 = vmatpush1.bf16.msra.mxu0 %v1034
      %1057 = vmatprep.subr.bf16.mxu0 0
      %1058 = vmatpush1.bf16.msra.mxu0 %v1035
      %1059 = vmatprep.subr.bf16.mxu0 0
      %1060 = vmatpush1.bf16.msra.mxu0 %v1036
      %1061 = vmatprep.subr.bf16.mxu0 0
      %1062 = vmatpush1.bf16.msra.mxu0 0
      %1063 = vmatprep.subr.bf16.mxu0 0
      %1064 = vmatpush1.bf16.msra.mxu0 0
      %1065 = vmatprep.subr.bf16.mxu0 0
      %1066 = vmatpush1.bf16.msra.mxu0 0
      %1067 = vmatprep.subr.bf16.mxu0 0
      %1068 = vmatpush1.bf16.msra.mxu0 0
      %1069 = vmatprep.subr.bf16.mxu0 0
      %1070 = vmatpush1.bf16.msra.mxu0 0
      %1071 = vmatprep.subr.bf16.mxu0 0
      %1072 = vmatpush1.bf16.msra.mxu0 0
      %1073 = vmatprep.subr.bf16.mxu0 0
      %1074 = vmatpush1.bf16.msra.mxu0 0
      %1075 = vmatprep.subr.bf16.mxu0 0
      %1076 = vmatpush1.bf16.msra.mxu0 0
      %1077 = vmatprep.mubr.bf16.mxu0 0
      %1078 = vmatmul.mubr.bf16.gmra.mrb[0].mxu0 %v970
      %v1079 = vpop.f32.mrb[0].mxu0
      %v1080 = vadd.f32 %v995, %v1079
      %v1081 = vpop.f32.mrb[0].mxu0
      %v1082 = vpop.f32.mrb[0].mxu0
      %v1083 = vadd.f32 %v995, %v1082
      %v1084 = vpop.f32.mrb[0].mxu0
      %1085 = vmatprep.mubr.bf16.mxu0 0
      %1086 = vmatmul.mubr.bf16.gmra.mrb[0].mxu0 %v971
      %v1087 = vpop.f32.mrb[0].mxu0
      %v1088 = vadd.f32 %v995, %v1087
      %v1089 = vpop.f32.mrb[0].mxu0
      %v1090 = vpop.f32.mrb[0].mxu0
      %v1091 = vadd.f32 %v995, %v1090
      %v1092 = vpop.f32.mrb[0].mxu0
      %1093 = vmatprep.mubr.bf16.mxu0 0
      %1094 = vmatmul.mubr.bf16.gmra.mrb[0].mxu0 %v972
      %v1095 = vpop.f32.mrb[0].mxu0
      %v1096 = vadd.f32 %v995, %v1095
      %v1097 = vpop.f32.mrb[0].mxu0
      %v1098 = vpop.f32.mrb[0].mxu0
      %v1099 = vadd.f32 %v995, %v1098
      %v1100 = vpop.f32.mrb[0].mxu0
      %1101 = vmatprep.mubr.bf16.mxu0 0
      %1102 = vmatmul.mubr.bf16.gmra.mrb[0].mxu0 %v973
      %v1103 = vpop.f32.mrb[0].mxu0
      %v1104 = vadd.f32 %v995, %v1103
      %v1105 = vpop.f32.mrb[0].mxu0
      %v1106 = vpop.f32.mrb[0].mxu0
      %v1107 = vadd.f32 %v995, %v1106
      %v1108 = vpop.f32.mrb[0].mxu0
      %1109 = vdwg.mxu0
      %1110 = vst [vmem:[%s229] sm:$0xff] %v1080
      %1111 = vst [vmem:[%s229 + $0x8] sm:$0xff] %v1083
      %1112 = vst [vmem:[%s229 + $0x10] sm:$0xff] %v1088
      %1113 = vst [vmem:[%s229 + $0x18] sm:$0xff] %v1091
      %1114 = vst [vmem:[%s229 + $0x20] sm:$0xff] %v1096
      %1115 = vst [vmem:[%s229 + $0x28] sm:$0xff] %v1099
      %1116 = vst [vmem:[%s229 + $0x30] sm:$0xff] %v1104
      %1117 = vst [vmem:[%s229 + $0x38] sm:$0xff] %v1107
      %s1118 = smul.u32 8, %s16
      %p1119 = scmp.lt.s32.totalorder %s1118, 15
      %s1120 = scalar_select %p1119, %s1118, 15
      %s1121 = smul.addr %s1120, 8
      %s1122 = scalar_lea.vmem %s5, %s1121
      // Predicated region
      $region41: #{bert_crf_head.1} parent=39 // pred_check
        %p1123 = pneg %p144
      $region42: #{bert_crf_head.1} parent=39 // pred_check_branch
        %1125 = sbr.rel (%p1123) target = $region44
      $region43: #{bert_crf_head.1} parent=39 // pred_region
        %s1126 = smul.u32 8, %s16
      $region44: #{bert_crf_head.1} parent=39 // pred_fallthru
        _
    $region40: #{bert_crf_head.1} parent=5 // pred_fallthru
      _
    %p1127 = scmp.le.s32.totalorder 2, %s11
    // Predicated region
    $region45: #{bert_crf_head.1} parent=5 // pred_check
      %p1128 = pneg %p1127
    $region46: #{bert_crf_head.1} parent=5 // pred_check_branch
      %1130 = sbr.rel (%p1128) target = $region48
    $region47: #{bert_crf_head.1} parent=5 // pred_region
      %s1131 = ssub.s32 %s11, 2
      // Predicated region
      $region49: #{bert_crf_head.1} parent=47 // pred_check
        %p1132 = pneg %p150
      $region50: #{bert_crf_head.1} parent=47 // pred_check_branch
        %1134 = sbr.rel (%p1132) target = $region52
      $region51: #{bert_crf_head.1} parent=47 // pred_region
        %s1135 = smul.u32 8, %s17
        %p1136 = scmp.lt.s32.totalorder %s1135, 15
        %s1137 = scalar_select %p1136, %s1135, 15
        %s1138 = smul.addr %s1137, 8
        %s1139 = scalar_lea.vmem %s5, %s1138
      $region52: #{bert_crf_head.1} parent=47 // pred_fallthru
        _
    $region48: #{bert_crf_head.1} parent=5 // pred_fallthru
      _
  $region6: #{bert_crf_head.1} parent=0 // loop_footer
    %s15 = sadd.s32 1, %s11
  $region7: #{bert_crf_head.1} parent=0 // loop_footer_branch
    %10 = sbr.rel target = $region3
  $region8: #{bert_crf_head.1} parent=0 // loop_exit
    _

</llo_original>
